<compile_context>
chip_gen: v6e
topology: v6e:2x2x1
jax: 0.10.0
libtpu: 0.0.40
codegen_flags: <defaults>
</compile_context>

<pallas_src>
import functools
from typing import NamedTuple

import jax
import jax.numpy as jnp
from jax.experimental import pallas as pl
from jax.experimental.pallas import tpu as pltpu

LOG_STD_MAX = 2.0
LOG_STD_MIN = -20.0


def _softplus(x):
    # numerically-stable softplus, VPU/EUP friendly
    return jnp.maximum(x, 0.0) + jnp.log1p(jnp.exp(-jnp.abs(x)))


def actor_kernel(limit_ref, obs_ref, w1_ref, b1_ref, w2_ref, b2_ref,
                 wh_ref, bh_ref, eps_ref, out_ref, *, act_dim, act_pad):
    act_limit = limit_ref[0, 0]

    # net = mlp([obs_dim, h1, h2], ReLU, ReLU): activation after BOTH layers.
    x = obs_ref[...].astype(w1_ref.dtype)
    h = jnp.dot(x, w1_ref[...], preferred_element_type=jnp.float32) + b1_ref[...]
    h = jnp.maximum(h, 0.0)
    h = jnp.dot(h.astype(w2_ref.dtype), w2_ref[...],
                preferred_element_type=jnp.float32) + b2_ref[...]
    h = jnp.maximum(h, 0.0)

    # Fused, lane-padded mu / log_std head: one 2*act_pad-wide MXU pass.
    # mu lives in lanes [0, act_dim); log_std in lanes [act_pad, act_pad+act_dim)
    # (both slices start at a vreg boundary -> no lane rotate).
    head = jnp.dot(h.astype(wh_ref.dtype), wh_ref[...],
                   preferred_element_type=jnp.float32) + bh_ref[...]
    mu = head[:, :act_dim]
    log_std = jnp.clip(head[:, act_pad:act_pad + act_dim], LOG_STD_MIN, LOG_STD_MAX)
    std = jnp.exp(log_std)

    # reparameterized sample: pi = mu + std * eps
    eps = eps_ref[...].astype(jnp.float32)
    pi = mu + std * eps

    # Normal(mu, std).log_prob(pi).sum(-1) with (pi - mu)/std == eps by
    # construction, plus the tanh-squash correction. Only real lanes exist here.
    half_log_2pi = 0.5 * jnp.log(2.0 * jnp.pi)
    log2 = jnp.log(2.0)
    elt = (-0.5 * eps * eps - log_std - half_log_2pi
           - 2.0 * (log2 - pi - _softplus(-2.0 * pi)))
    logp = jnp.sum(elt, axis=-1, keepdims=True)              # (TB, 1)

    # Narrow (act_dim + 1)-lane output block: [ action | logp ].
    out_ref[:, :act_dim] = (act_limit * jnp.tanh(pi)).astype(out_ref.dtype)
    out_ref[:, act_dim:] = logp.astype(out_ref.dtype)


class PreparedActorParams(NamedTuple):
    w1: jax.Array
    b1: jax.Array
    w2: jax.Array
    b2: jax.Array
    w_head: jax.Array
    b_head: jax.Array
    act_dim: int
    act_pad: int


def prepare_actor_params(params, matmul_dtype=jnp.bfloat16):
    """One-time preprocessing, hoisted out of the per-step forward path.

    Fuses the mu/log_std heads into one lane-padded weight, reshapes 1-D
    PyTorch-style biases to (1, N), and casts matmul operands to
    `matmul_dtype` (bf16 default: native MXU dtype on v5e/v6e/v7x; the
    kernel accumulates in f32). Biases stay f32 (added post-accumulation).
    """
    w1, b1, w2, b2, wmu, bmu, wls, bls = params
    as_row = lambda b: jnp.asarray(b, jnp.float32).reshape(1, -1)
    b1, b2, bmu, bls = map(as_row, (b1, b2, bmu, bls))

    act_dim = wmu.shape[1]
    assert act_dim <= 128, "act_dim must fit inside one 128-lane block"
    act_pad = 128 * pl.cdiv(act_dim, 128)
    col_pad = act_pad - act_dim

    w_head = jnp.concatenate(
        [jnp.pad(wmu, ((0, 0), (0, col_pad))),
         jnp.pad(wls, ((0, 0), (0, col_pad)))], axis=1).astype(matmul_dtype)
    b_head = jnp.concatenate(
        [jnp.pad(bmu, ((0, 0), (0, col_pad))),
         jnp.pad(bls, ((0, 0), (0, col_pad)))], axis=1)

    return PreparedActorParams(
        w1=jnp.asarray(w1).astype(matmul_dtype), b1=b1,
        w2=jnp.asarray(w2).astype(matmul_dtype), b2=b2,
        w_head=w_head, b_head=b_head, act_dim=act_dim, act_pad=act_pad)


def _tile_bytes(rows, cols, dtype):
    """Approx VMEM footprint of a (rows, cols) tile after native tiling."""
    itemsize = jnp.dtype(dtype).itemsize
    sub = {4: 8, 2: 16, 1: 32}.get(itemsize, 8)
    return (sub * pl.cdiv(rows, sub)) * (128 * pl.cdiv(cols, 128)) * itemsize


def squashed_gaussian_actor_forward(obs, prep, eps, act_limit, *,
                                    tile_b=512, single_buffer_weights=False,
                                    vmem_limit_bytes=None):
    """Actor forward (deterministic=False, with_logprob=True).

    Returns (pi_action, logp_pi). `prep` comes from prepare_actor_params().
    """
    B, obs_dim = obs.shape
    h1 = prep.w1.shape[1]
    h2 = prep.w2.shape[1]
    act_dim, act_pad = prep.act_dim, prep.act_pad
    assert eps.shape == (B, act_dim)

    # Batch tiling: TB is a multiple of 8 sublanes; prefer fat tiles, but
    # guarantee >= 2 grid steps when the batch allows it so the "parallel"
    # axis can shard across both TensorCores on v7x.
    B8 = 8 * pl.cdiv(B, 8)
    TB = min(8 * pl.cdiv(int(tile_b), 8), B8)
    if B8 // TB < 2 and B8 >= 16:
        TB = 8 * pl.cdiv(B8 // 2, 8)
    B_pad = TB * pl.cdiv(B, TB)

    pad_rows = B_pad - B
    obs_p = jnp.pad(obs, ((0, pad_rows), (0, 0))) if pad_rows else obs
    eps_p = jnp.pad(eps, ((0, pad_rows), (0, 0))) if pad_rows else eps
    limit = jnp.full((1, 1), act_limit, jnp.float32)

    if single_buffer_weights:
        # Constant-index blocks never need double buffering; halves weight
        # VMEM footprint (matters for wide hidden layers on v7x's 64 MiB).
        wspec = lambda shape: pl.BlockSpec(shape, lambda i: (0, 0),
                                           pipeline_mode=pl.Buffered(1))
    else:
        wspec = lambda shape: pl.BlockSpec(shape, lambda i: (0, 0))

    # Size the scoped-VMEM limit from actual residency (weights + streamed
    # double-buffers + f32 intermediates); only override the default when
    # the estimate would exceed the smallest default scope (16 MiB on v5e).
    if vmem_limit_bytes is None:
        wd = prep.w1.dtype
        wbufs = 1 if single_buffer_weights else 2
        weights = wbufs * (
            _tile_bytes(obs_dim, h1, wd) + _tile_bytes(h1, h2, wd)
            + _tile_bytes(h2, 2 * act_pad, wd)
            + _tile_bytes(1, h1, jnp.float32) + _tile_bytes(1, h2, jnp.float32)
            + _tile_bytes(1, 2 * act_pad, jnp.float32))
        streams = 2 * (_tile_bytes(TB, obs_dim, obs.dtype)
                       + _tile_bytes(TB, act_dim, eps.dtype)
                       + _tile_bytes(TB, act_dim + 1, jnp.float32))
        interm = (_tile_bytes(TB, h1, jnp.float32)
                  + _tile_bytes(TB, h2, jnp.float32)
                  + _tile_bytes(TB, 2 * act_pad, jnp.float32))
        est = weights + streams + 2 * interm
        if est > 16 * 1024 * 1024:
            vmem_limit_bytes = min(2 * est, 64 * 1024 * 1024)

    cp_kwargs = dict(dimension_semantics=("parallel",))
    if vmem_limit_bytes is not None:
        cp_kwargs["vmem_limit_bytes"] = int(vmem_limit_bytes)

    out = pl.pallas_call(
        functools.partial(actor_kernel, act_dim=act_dim, act_pad=act_pad),
        out_shape=jax.ShapeDtypeStruct((B_pad, act_dim + 1), jnp.float32),
        grid=(B_pad // TB,),
        in_specs=[
            pl.BlockSpec(memory_space=pltpu.MemorySpace.SMEM),   # act_limit scalar
            pl.BlockSpec((TB, obs_dim), lambda i: (i, 0)),       # obs tile
            wspec((obs_dim, h1)), wspec((1, h1)),                # layer 1 (VMEM-resident)
            wspec((h1, h2)), wspec((1, h2)),                     # layer 2
            wspec((h2, 2 * act_pad)), wspec((1, 2 * act_pad)),   # fused head
            pl.BlockSpec((TB, act_dim), lambda i: (i, 0)),       # eps tile (unpadded)
        ],
        out_specs=pl.BlockSpec((TB, act_dim + 1), lambda i: (i, 0)),
        compiler_params=pltpu.CompilerParams(**cp_kwargs),
    )(limit, obs_p, prep.w1, prep.b1, prep.w2, prep.b2,
      prep.w_head, prep.b_head, eps_p)

    pi_action = out[:B, :act_dim]
    logp_pi = out[:B, act_dim]
    return pi_action, logp_pi


def _reference_forward(obs, params, eps, act_limit):
    """Pure-JAX reference of the PyTorch forward (deterministic=False, with_logprob=True)."""
    w1, b1, w2, b2, wmu, bmu, wls, bls = params
    h = jnp.maximum(obs @ w1 + b1, 0.0)
    h = jnp.maximum(h @ w2 + b2, 0.0)
    mu = h @ wmu + bmu
    log_std = jnp.clip(h @ wls + bls, LOG_STD_MIN, LOG_STD_MAX)
    std = jnp.exp(log_std)
    pi = mu + std * eps
    z = (pi - mu) / std
    logp = jnp.sum(-0.5 * z * z - log_std - 0.5 * jnp.log(2.0 * jnp.pi), axis=-1)
    logp -= jnp.sum(2.0 * (jnp.log(2.0) - pi - jax.nn.softplus(-2.0 * pi)), axis=-1)
    return act_limit * jnp.tanh(pi), logp


if __name__ == "__main__":
    # Small SAC-actor shapes: obs_dim=16, hidden_sizes=(32, 32), act_dim=8, batch=2
    B, obs_dim, h1, h2, act_dim = 2, 16, 32, 32, 8
    act_limit = 1.5

    key = jax.random.PRNGKey(0)
    keys = jax.random.split(key, 10)

    def init_linear(kw, kb, fan_in, fan_out):
        # deterministic uniform init (PyTorch-style bound), synthetic weights
        bound = 1.0 / jnp.sqrt(jnp.float32(fan_in))
        w = jax.random.uniform(kw, (fan_in, fan_out), jnp.float32, -bound, bound)
        b = jax.random.uniform(kb, (1, fan_out), jnp.float32, -bound, bound)
        return w, b

    w1, b1 = init_linear(keys[0], keys[1], obs_dim, h1)
    w2, b2 = init_linear(keys[2], keys[3], h1, h2)
    wmu, bmu = init_linear(keys[4], keys[5], h2, act_dim)
    wls, bls = init_linear(keys[6], keys[7], h2, act_dim)
    params = (w1, b1, w2, b2, wmu, bmu, wls, bls)

    obs = jax.random.normal(keys[8], (B, obs_dim), jnp.float32)
    eps = jax.random.normal(keys[9], (B, act_dim), jnp.float32)  # torch.randn equivalent

    ref_act, ref_logp = _reference_forward(obs, params, eps, act_limit)

    # ---- fp32 matmul path: tight parity with the reference math ------------
    prep_f32 = prepare_actor_params(params, matmul_dtype=jnp.float32)
    pi_f32, logp_f32 = squashed_gaussian_actor_forward(obs, prep_f32, eps, act_limit)
    jax.block_until_ready((pi_f32, logp_f32))
    assert pi_f32.shape == (B, act_dim) and logp_f32.shape == (B,)
    assert jnp.allclose(pi_f32, ref_act, rtol=1e-5, atol=1e-5)
    assert jnp.allclose(logp_f32, ref_logp, rtol=1e-5, atol=1e-5)

    # ---- default bf16 matmul path (f32 accumulation): looser tolerance -----
    prep_bf16 = prepare_actor_params(params)   # bf16 operands by default
    pi_bf16, logp_bf16 = squashed_gaussian_actor_forward(obs, prep_bf16, eps, act_limit)
    jax.block_until_ready((pi_bf16, logp_bf16))
    assert pi_bf16.shape == (B, act_dim) and logp_bf16.shape == (B,)
    assert jnp.allclose(pi_bf16, ref_act, rtol=5e-2, atol=5e-2)
    assert jnp.allclose(logp_bf16, ref_logp, rtol=5e-2, atol=5e-1)

    print("KERNEL_OK")
</pallas_src>

<mosaic_0001>
module attributes {stable_mosaic.version = 11 : i64} {
  func.func @actor_kernel(%arg0: i32, %arg1: memref<1x1xf32, #tpu.memory_space<smem>>, %arg2: memref<8x16xf32, #tpu.memory_space<vmem>>, %arg3: memref<16x32xf32, #tpu.memory_space<vmem>>, %arg4: memref<1x32xf32, #tpu.memory_space<vmem>>, %arg5: memref<32x32xf32, #tpu.memory_space<vmem>>, %arg6: memref<1x32xf32, #tpu.memory_space<vmem>>, %arg7: memref<32x256xf32, #tpu.memory_space<vmem>>, %arg8: memref<1x256xf32, #tpu.memory_space<vmem>>, %arg9: memref<8x8xf32, #tpu.memory_space<vmem>>, %arg10: memref<8x9xf32, #tpu.memory_space<vmem>>) attributes {dimension_semantics = [#tpu.dimension_semantics<parallel>], iteration_bounds = array<i64: 1>, scalar_prefetch = 0 : i64, scratch_operands = 0 : i64, tpu.core_type = #tpu.core_type<tc>, window_params = [{transform_indices = @transform_0, window_bounds = array<i64: 1, 1>}, {transform_indices = @transform_1, window_bounds = array<i64: 8, 16>}, {pipeline_mode = #tpu.pipeline_mode<synchronous>, transform_indices = @transform_2, window_bounds = array<i64: 16, 32>}, {pipeline_mode = #tpu.pipeline_mode<synchronous>, transform_indices = @transform_3, window_bounds = array<i64: 1, 32>}, {pipeline_mode = #tpu.pipeline_mode<synchronous>, transform_indices = @transform_4, window_bounds = array<i64: 32, 32>}, {pipeline_mode = #tpu.pipeline_mode<synchronous>, transform_indices = @transform_5, window_bounds = array<i64: 1, 32>}, {pipeline_mode = #tpu.pipeline_mode<synchronous>, transform_indices = @transform_6, window_bounds = array<i64: 32, 256>}, {pipeline_mode = #tpu.pipeline_mode<synchronous>, transform_indices = @transform_7, window_bounds = array<i64: 1, 256>}, {transform_indices = @transform_8, window_bounds = array<i64: 8, 8>}, {transform_indices = @transform_9, window_bounds = array<i64: 8, 9>}]} {
    %c0 = arith.constant 0 : index
    %c0_0 = arith.constant 0 : index
    %0 = memref.load %arg1[%c0, %c0_0] : memref<1x1xf32, #tpu.memory_space<smem>>
    %c0_1 = arith.constant 0 : index
    %c0_2 = arith.constant 0 : index
    %1 = vector.load %arg2[%c0_1, %c0_2] : memref<8x16xf32, #tpu.memory_space<vmem>>, vector<8x16xf32>
    %c0_3 = arith.constant 0 : index
    %c0_4 = arith.constant 0 : index
    %2 = vector.load %arg3[%c0_3, %c0_4] : memref<16x32xf32, #tpu.memory_space<vmem>>, vector<16x32xf32>
    %cst = arith.constant dense<0.000000e+00> : vector<8x32xf32>
    %3 = tpu.matmul %1, %2, %cst {dimension_numbers = #tpu.dot_dimension_numbers<[1], [0], [0], [1], [0, 0, 1, 1], [], []>} : vector<8x16xf32>, vector<16x32xf32>, vector<8x32xf32> -> vector<8x32xf32>
    %c0_5 = arith.constant 0 : index
    %c0_6 = arith.constant 0 : index
    %4 = vector.load %arg4[%c0_5, %c0_6] : memref<1x32xf32, #tpu.memory_space<vmem>>, vector<1x32xf32>
    %5 = vector.broadcast %4 : vector<1x32xf32> to vector<8x32xf32>
    %6 = arith.addf %3, %5 : vector<8x32xf32>
    %cst_7 = arith.constant 0.000000e+00 : f32
    %7 = vector.broadcast %cst_7 : f32 to vector<8x32xf32>
    %8 = arith.maximumf %6, %7 : vector<8x32xf32>
    %c0_8 = arith.constant 0 : index
    %c0_9 = arith.constant 0 : index
    %9 = vector.load %arg5[%c0_8, %c0_9] : memref<32x32xf32, #tpu.memory_space<vmem>>, vector<32x32xf32>
    %cst_10 = arith.constant dense<0.000000e+00> : vector<8x32xf32>
    %10 = tpu.matmul %8, %9, %cst_10 {dimension_numbers = #tpu.dot_dimension_numbers<[1], [0], [0], [1], [0, 0, 1, 1], [], []>} : vector<8x32xf32>, vector<32x32xf32>, vector<8x32xf32> -> vector<8x32xf32>
    %c0_11 = arith.constant 0 : index
    %c0_12 = arith.constant 0 : index
    %11 = vector.load %arg6[%c0_11, %c0_12] : memref<1x32xf32, #tpu.memory_space<vmem>>, vector<1x32xf32>
    %12 = vector.broadcast %11 : vector<1x32xf32> to vector<8x32xf32>
    %13 = arith.addf %10, %12 : vector<8x32xf32>
    %cst_13 = arith.constant 0.000000e+00 : f32
    %14 = vector.broadcast %cst_13 : f32 to vector<8x32xf32>
    %15 = arith.maximumf %13, %14 : vector<8x32xf32>
    %c0_14 = arith.constant 0 : index
    %c0_15 = arith.constant 0 : index
    %16 = vector.load %arg7[%c0_14, %c0_15] : memref<32x256xf32, #tpu.memory_space<vmem>>, vector<32x256xf32>
    %cst_16 = arith.constant dense<0.000000e+00> : vector<8x256xf32>
    %17 = tpu.matmul %15, %16, %cst_16 {dimension_numbers = #tpu.dot_dimension_numbers<[1], [0], [0], [1], [0, 0, 1, 1], [], []>} : vector<8x32xf32>, vector<32x256xf32>, vector<8x256xf32> -> vector<8x256xf32>
    %c0_17 = arith.constant 0 : index
    %c0_18 = arith.constant 0 : index
    %18 = vector.load %arg8[%c0_17, %c0_18] : memref<1x256xf32, #tpu.memory_space<vmem>>, vector<1x256xf32>
    %19 = vector.broadcast %18 : vector<1x256xf32> to vector<8x256xf32>
    %20 = arith.addf %17, %19 : vector<8x256xf32>
    %21 = vector.extract_strided_slice %20 {offsets = [0, 0], sizes = [8, 8], strides = [1, 1]} : vector<8x256xf32> to vector<8x8xf32>
    %22 = vector.extract_strided_slice %20 {offsets = [0, 128], sizes = [8, 8], strides = [1, 1]} : vector<8x256xf32> to vector<8x8xf32>
    %cst_19 = arith.constant -2.000000e+01 : f32
    %cst_20 = arith.constant 2.000000e+00 : f32
    %23 = vector.broadcast %cst_19 : f32 to vector<8x8xf32>
    %24 = arith.maximumf %23, %22 : vector<8x8xf32>
    %25 = vector.broadcast %cst_20 : f32 to vector<8x8xf32>
    %26 = arith.minimumf %25, %24 : vector<8x8xf32>
    %27 = math.exp %26 : vector<8x8xf32>
    %c0_21 = arith.constant 0 : index
    %c0_22 = arith.constant 0 : index
    %28 = vector.load %arg9[%c0_21, %c0_22] : memref<8x8xf32, #tpu.memory_space<vmem>>, vector<8x8xf32>
    %29 = arith.mulf %27, %28 : vector<8x8xf32>
    %30 = arith.addf %21, %29 : vector<8x8xf32>
    %cst_23 = arith.constant 6.28318548 : f32
    %31 = math.log %cst_23 : f32
    %cst_24 = arith.constant 5.000000e-01 : f32
    %32 = arith.mulf %cst_24, %31 : f32
    %cst_25 = arith.constant 2.000000e+00 : f32
    %33 = math.log %cst_25 : f32
    %cst_26 = arith.constant -5.000000e-01 : f32
    %34 = vector.broadcast %cst_26 : f32 to vector<8x8xf32>
    %35 = arith.mulf %34, %28 : vector<8x8xf32>
    %36 = arith.mulf %35, %28 : vector<8x8xf32>
    %37 = arith.subf %36, %26 : vector<8x8xf32>
    %38 = vector.broadcast %32 : f32 to vector<8x8xf32>
    %39 = arith.subf %37, %38 : vector<8x8xf32>
    %40 = vector.broadcast %33 : f32 to vector<8x8xf32>
    %41 = arith.subf %40, %30 : vector<8x8xf32>
    %cst_27 = arith.constant -2.000000e+00 : f32
    %42 = vector.broadcast %cst_27 : f32 to vector<8x8xf32>
    %43 = arith.mulf %42, %30 : vector<8x8xf32>
    %cst_28 = arith.constant 0.000000e+00 : f32
    %44 = vector.broadcast %cst_28 : f32 to vector<8x8xf32>
    %45 = arith.maximumf %43, %44 : vector<8x8xf32>
    %46 = math.absf %43 : vector<8x8xf32>
    %cst_29 = arith.constant 0.000000e+00 : f32
    %47 = vector.broadcast %cst_29 : f32 to vector<8x8xf32>
    %48 = arith.subf %47, %46 : vector<8x8xf32>
    %49 = math.exp %48 : vector<8x8xf32>
    %50 = math.log1p %49 : vector<8x8xf32>
    %51 = arith.addf %45, %50 : vector<8x8xf32>
    %52 = arith.subf %41, %51 : vector<8x8xf32>
    %cst_30 = arith.constant 2.000000e+00 : f32
    %53 = vector.broadcast %cst_30 : f32 to vector<8x8xf32>
    %54 = arith.mulf %53, %52 : vector<8x8xf32>
    %55 = arith.subf %39, %54 : vector<8x8xf32>
    %cst_31 = arith.constant dense<0.000000e+00> : vector<8xf32>
    %56 = vector.multi_reduction <add>, %55, %cst_31 [1] : vector<8x8xf32> to vector<8xf32>
    %57 = vector.shape_cast %56 : vector<8xf32> to vector<8x1xf32>
    %58 = math.tanh %30 : vector<8x8xf32>
    %59 = vector.broadcast %0 : f32 to vector<8x8xf32>
    %60 = arith.mulf %59, %58 : vector<8x8xf32>
    %c0_32 = arith.constant 0 : index
    %c0_33 = arith.constant 0 : index
    %61 = vector.load %arg10[%c0_32, %c0_33] : memref<8x9xf32, #tpu.memory_space<vmem>>, vector<8x8xf32>
    tpu.vector_store %arg10[%c0_32, %c0_33], %60 {strides = array<i32>} : memref<8x9xf32, #tpu.memory_space<vmem>>, vector<8x8xf32>,
    %c0_34 = arith.constant 0 : index
    %c8 = arith.constant 8 : index
    %62 = vector.load %arg10[%c0_34, %c8] : memref<8x9xf32, #tpu.memory_space<vmem>>, vector<8x1xf32>
    tpu.vector_store %arg10[%c0_34, %c8], %57 {strides = array<i32>} : memref<8x9xf32, #tpu.memory_space<vmem>>, vector<8x1xf32>,
    return
  }
  func.func @transform_0(%arg0: i32) -> (i32, i32) {
    %c0_i32 = arith.constant 0 : i32
    %c0_i32_0 = arith.constant 0 : i32
    %c0_i32_1 = arith.constant 0 : i32
    return %c0_i32, %c0_i32_0 : i32, i32
  }
  func.func @transform_1(%arg0: i32) -> (i32, i32) {
    %c0_i32 = arith.constant 0 : i32
    %c0_i32_0 = arith.constant 0 : i32
    return %arg0, %c0_i32 : i32, i32
  }
  func.func @transform_2(%arg0: i32) -> (i32, i32) {
    %c0_i32 = arith.constant 0 : i32
    %c0_i32_0 = arith.constant 0 : i32
    %c0_i32_1 = arith.constant 0 : i32
    return %c0_i32, %c0_i32_0 : i32, i32
  }
  func.func @transform_3(%arg0: i32) -> (i32, i32) {
    %c0_i32 = arith.constant 0 : i32
    %c0_i32_0 = arith.constant 0 : i32
    %c0_i32_1 = arith.constant 0 : i32
    return %c0_i32, %c0_i32_0 : i32, i32
  }
  func.func @transform_4(%arg0: i32) -> (i32, i32) {
    %c0_i32 = arith.constant 0 : i32
    %c0_i32_0 = arith.constant 0 : i32
    %c0_i32_1 = arith.constant 0 : i32
    return %c0_i32, %c0_i32_0 : i32, i32
  }
  func.func @transform_5(%arg0: i32) -> (i32, i32) {
    %c0_i32 = arith.constant 0 : i32
    %c0_i32_0 = arith.constant 0 : i32
    %c0_i32_1 = arith.constant 0 : i32
    return %c0_i32, %c0_i32_0 : i32, i32
  }
  func.func @transform_6(%arg0: i32) -> (i32, i32) {
    %c0_i32 = arith.constant 0 : i32
    %c0_i32_0 = arith.constant 0 : i32
    %c0_i32_1 = arith.constant 0 : i32
    return %c0_i32, %c0_i32_0 : i32, i32
  }
  func.func @transform_7(%arg0: i32) -> (i32, i32) {
    %c0_i32 = arith.constant 0 : i32
    %c0_i32_0 = arith.constant 0 : i32
    %c0_i32_1 = arith.constant 0 : i32
    return %c0_i32, %c0_i32_0 : i32, i32
  }
  func.func @transform_8(%arg0: i32) -> (i32, i32) {
    %c0_i32 = arith.constant 0 : i32
    %c0_i32_0 = arith.constant 0 : i32
    return %arg0, %c0_i32 : i32, i32
  }
  func.func @transform_9(%arg0: i32) -> (i32, i32) {
    %c0_i32 = arith.constant 0 : i32
    %c0_i32_0 = arith.constant 0 : i32
    return %arg0, %c0_i32 : i32, i32
  }
}

</mosaic_0001>

<llo_original>
// kernel: tpu_custom_call.1
$region0: #{tpu_custom_call.1}
  #allocation0 [shape = 'u32[]', space=smem, size = 0x4, offset = 0x4, fixed_abs, tag = 'smem constant byte address 0x4 - core index']
  #allocation1 [shape = 'u32[144,128]{1,0:T(1,128)}', space=vmem, size = 0x12000, scoped, tag = 'internal scratch']
  #allocation2 [shape = 'f32[1,1]{1,0:T(1,128)S(6)}', space=smem, size = 0x200, scoped, tag = 'scoped memory for tpu_custom_call.1']
  %s0 = inlined_call_operand.<no memory space> [shape: f32[1,1], index: 0, kind: input, shape index: {}]
  %s1 = inlined_call_operand.hbm [shape: f32[8,16], index: 1, kind: input, shape index: {}]
  %s2 = inlined_call_operand.hbm [shape: f32[16,32], index: 2, kind: input, shape index: {}]
  %s3 = inlined_call_operand.vmem [shape: f32[1,32], index: 3, kind: input, shape index: {}]
  %s4 = inlined_call_operand.hbm [shape: f32[32,32], index: 4, kind: input, shape index: {}]
  %s5 = inlined_call_operand.vmem [shape: f32[1,32], index: 5, kind: input, shape index: {}]
  %s6 = inlined_call_operand.hbm [shape: f32[32,256], index: 6, kind: input, shape index: {}]
  %s7 = inlined_call_operand.vmem [shape: f32[1,256], index: 7, kind: input, shape index: {}]
  %s8 = inlined_call_operand.vmem [shape: f32[8,8], index: 8, kind: input, shape index: {}]
  %s9 = inlined_call_operand.hbm [shape: f32[8,9], index: 9, kind: output, shape index: {}]
  %s10 = sld [smem:[#allocation0]]
  $region62: #{tpu_custom_call.1} parent=0
    _
  %s12 = ssub.s32 1, %s10
  %s13 = scalar_select 0, %s12, %s10
  %14 = sst [smem:[#allocation2]] %s0
  $region1: #{tpu_custom_call.1} parent=0
    #allocation3 [shape = 'u8[4096]{0}', space=vmem, size = 0x1000, scoped, tag = 'input window, operand 1, single buffered']
    #allocation4 [shape = 's32[1]{0}', space=sflag, size = 0x4, scoped, tag = 'scoped memory for tpu_custom_call.1']
    #allocation5 [shape = 's32[1]{0}', space=sflag, size = 0x4, scoped, tag = 'scoped memory for tpu_custom_call.1']
    #allocation6 [shape = 'u8[8192]{0}', space=vmem, size = 0x2000, scoped, tag = 'input window, operand 2, single buffered']
    #allocation7 [shape = 's32[1]{0}', space=sflag, size = 0x4, scoped, tag = 'scoped memory for tpu_custom_call.1']
    #allocation8 [shape = 'u8[16384]{0}', space=vmem, size = 0x4000, scoped, tag = 'input window, operand 4, single buffered']
    #allocation9 [shape = 'u8[32768]{0}', space=vmem, size = 0x8000, scoped, tag = 'input window, operand 6, single buffered']
    #allocation10 [shape = 's32[1]{0}', space=sflag, size = 0x4, scoped, tag = 'scoped memory for tpu_custom_call.1']
    #allocation11 [shape = 'u8[4096]{0}', space=vmem, size = 0x1000, scoped, tag = 'output window, operand 0, single buffered']
    %15 = vsyncpa [#allocation4], 0
    %16 = vsyncpa [#allocation7], 0
    %17 = vsyncpa [#allocation10], 0
    %18 = vsyncpa [#allocation5], 0
    // Predicated region
    $region2: #{tpu_custom_call.1} parent=1 // pred_check
      _
    $region3: #{tpu_custom_call.1} parent=1 // pred_check_branch
      %20 = sbr.rel (0) target = $region5
    $region4: #{tpu_custom_call.1} parent=1 // pred_region
      _
    $region5: #{tpu_custom_call.1} parent=1 // pred_fallthru
      _
    // Predicated region
    $region6: #{tpu_custom_call.1} parent=1 // pred_check
      _
    $region7: #{tpu_custom_call.1} parent=1 // pred_check_branch
      %22 = sbr.rel (0) target = $region9
    $region8: #{tpu_custom_call.1} parent=1 // pred_region
      %s24 = ssub.s32 128, 128
      %25 = vsyncadd [#allocation4], %s24
      %s27 = sshll.u32 [#allocation3], 4
      %s28 = int_to_ptr.vmem [resolvable:$true] %s27
      %30 = dma.hbm_to_vmem [thread:$0]  %s1, 128, %s28, [#allocation4]
    $region9: #{tpu_custom_call.1} parent=1 // pred_fallthru
      _
    // Predicated region
    $region10: #{tpu_custom_call.1} parent=1 // pred_check
      _
    $region11: #{tpu_custom_call.1} parent=1 // pred_check_branch
      %32 = sbr.rel (0) target = $region13
    $region12: #{tpu_custom_call.1} parent=1 // pred_region
      %s34 = ssub.s32 256, 256
      %35 = vsyncadd [#allocation7], %s34
      %s36 = sshll.u32 [#allocation6], 4
      %s37 = int_to_ptr.vmem [resolvable:$true] %s36
      %42 = dma.hbm_to_vmem [thread:$0]  %s2, 256, %s37, [#allocation7], 128, 128, 8
    $region13: #{tpu_custom_call.1} parent=1 // pred_fallthru
      _
    // Predicated region
    $region14: #{tpu_custom_call.1} parent=1 // pred_check
      _
    $region15: #{tpu_custom_call.1} parent=1 // pred_check_branch
      %44 = sbr.rel (0) target = $region17
    $region16: #{tpu_custom_call.1} parent=1 // pred_region
      _
    $region17: #{tpu_custom_call.1} parent=1 // pred_fallthru
      _
    // Predicated region
    $region18: #{tpu_custom_call.1} parent=1 // pred_check
      _
    $region19: #{tpu_custom_call.1} parent=1 // pred_check_branch
      %46 = sbr.rel (0) target = $region21
    $region20: #{tpu_custom_call.1} parent=1 // pred_region
      %s48 = ssub.s32 512, 512
      %49 = vsyncadd [#allocation7], %s48
      %s50 = sshll.u32 [#allocation8], 4
      %s51 = int_to_ptr.vmem [resolvable:$true] %s50
      %56 = dma.hbm_to_vmem [thread:$0]  %s4, 512, %s51, [#allocation7], 128, 128, 8
    $region21: #{tpu_custom_call.1} parent=1 // pred_fallthru
      _
    // Predicated region
    $region22: #{tpu_custom_call.1} parent=1 // pred_check
      _
    $region23: #{tpu_custom_call.1} parent=1 // pred_check_branch
      %58 = sbr.rel (0) target = $region25
    $region24: #{tpu_custom_call.1} parent=1 // pred_region
      _
    $region25: #{tpu_custom_call.1} parent=1 // pred_fallthru
      _
    // Predicated region
    $region26: #{tpu_custom_call.1} parent=1 // pred_check
      _
    $region27: #{tpu_custom_call.1} parent=1 // pred_check_branch
      %60 = sbr.rel (0) target = $region29
    $region28: #{tpu_custom_call.1} parent=1 // pred_region
      %s62 = ssub.s32 1024, 1024
      %63 = vsyncadd [#allocation10], %s62
      %s64 = sshll.u32 [#allocation9], 4
      %s65 = int_to_ptr.vmem [resolvable:$true] %s64
      %70 = dma.hbm_to_vmem [thread:$0]  %s6, 1024, %s65, [#allocation10], 256, 256, 16
    $region29: #{tpu_custom_call.1} parent=1 // pred_fallthru
      _
    // Predicated region
    $region30: #{tpu_custom_call.1} parent=1 // pred_check
      _
    $region31: #{tpu_custom_call.1} parent=1 // pred_check_branch
      %72 = sbr.rel (0) target = $region33
    $region32: #{tpu_custom_call.1} parent=1 // pred_region
      _
    $region33: #{tpu_custom_call.1} parent=1 // pred_fallthru
      _
    // Predicated region
    $region34: #{tpu_custom_call.1} parent=1 // pred_check
      _
    $region35: #{tpu_custom_call.1} parent=1 // pred_check_branch
      %74 = sbr.rel (0) target = $region37
    $region36: #{tpu_custom_call.1} parent=1 // pred_region
      _
    $region37: #{tpu_custom_call.1} parent=1 // pred_fallthru
      _
    // Predicated region
    $region38: #{tpu_custom_call.1} parent=1 // pred_check
      _
    $region39: #{tpu_custom_call.1} parent=1 // pred_check_branch
      %76 = sbr.rel (0) target = $region41
    $region40: #{tpu_custom_call.1} parent=1 // pred_region
      %77 = dma.done [#allocation4], 128
    $region41: #{tpu_custom_call.1} parent=1 // pred_fallthru
      _
    // Predicated region
    $region42: #{tpu_custom_call.1} parent=1 // pred_check
      _
    $region43: #{tpu_custom_call.1} parent=1 // pred_check_branch
      %79 = sbr.rel (0) target = $region45
    $region44: #{tpu_custom_call.1} parent=1 // pred_region
      %80 = dma.done [#allocation7], 256
    $region45: #{tpu_custom_call.1} parent=1 // pred_fallthru
      _
    // Predicated region
    $region46: #{tpu_custom_call.1} parent=1 // pred_check
      _
    $region47: #{tpu_custom_call.1} parent=1 // pred_check_branch
      %82 = sbr.rel (0) target = $region49
    $region48: #{tpu_custom_call.1} parent=1 // pred_region
      %83 = dma.done [#allocation7], 512
    $region49: #{tpu_custom_call.1} parent=1 // pred_fallthru
      _
    // Predicated region
    $region50: #{tpu_custom_call.1} parent=1 // pred_check
      _
    $region51: #{tpu_custom_call.1} parent=1 // pred_check_branch
      %85 = sbr.rel (0) target = $region53
    $region52: #{tpu_custom_call.1} parent=1 // pred_region
      %86 = dma.done [#allocation10], 1024
    $region53: #{tpu_custom_call.1} parent=1 // pred_fallthru
      _
    %s87 = sld [smem:[#allocation2]]
    %v88 = vld [vmem:[#allocation3] sm:$0xff]
    %v89 = vld [vmem:[#allocation6] sm:$0xff]
    %v90 = vld [vmem:[#allocation6 + $0x8] sm:$0xff]
    %v91 = vld [vmem:[%s3] sm:$0x1]
    %v93 = vlaneseq
    %v94 = vshrl.u32 %v93, 7
    %v95 = vsub.s32 0, %v94
    %v96 = vrot.slane %v91, %v95
    %vm98 = vcmask 130048
    %v100 = vsel %vm98, %v88, 0
    %102 = vmatprep.subr.mxu0 0.0
    %103 = vmatpush1.msra.mxu0 0.0
    %104 = vmatprep.subr.mxu0 0.0
    %105 = vmatpush1.msra.mxu0 0.0
    %106 = vmatprep.subr.mxu0 0.0
    %107 = vmatpush1.msra.mxu0 0.0
    %108 = vmatprep.subr.mxu0 0.0
    %109 = vmatpush1.msra.mxu0 0.0
    %110 = vmatprep.subr.mxu0 0.0
    %111 = vmatpush1.msra.mxu0 0.0
    %112 = vmatprep.subr.mxu0 0.0
    %113 = vmatpush1.msra.mxu0 0.0
    %114 = vmatprep.subr.mxu0 0.0
    %115 = vmatpush1.msra.mxu0 0.0
    %116 = vmatprep.subr.mxu0 0.0
    %117 = vmatpush1.msra.mxu0 0.0
    %118 = vmatprep.subr.mxu0 0.0
    %119 = vmatpush1.msra.mxu0 0.0
    %120 = vmatprep.subr.mxu0 0.0
    %121 = vmatpush1.msra.mxu0 0.0
    %122 = vmatprep.subr.mxu0 0.0
    %123 = vmatpush1.msra.mxu0 0.0
    %124 = vmatprep.subr.mxu0 0.0
    %125 = vmatpush1.msra.mxu0 0.0
    %126 = vmatprep.subr.mxu0 0.0
    %127 = vmatpush1.msra.mxu0 0.0
    %128 = vmatprep.subr.mxu0 0.0
    %129 = vmatpush1.msra.mxu0 0.0
    %130 = vmatprep.subr.mxu0 0.0
    %131 = vmatpush1.msra.mxu0 %v90
    %132 = vmatprep.subr.mxu0 0.0
    %133 = vmatpush1.msra.mxu0 %v89
    %134 = vmatprep.subr.mxu0 0.0
    %135 = vmatpush2.msra.mxu0 0.0
    %136 = vmatprep.subr.mxu0 0.0
    %137 = vmatpush2.msra.mxu0 0.0
    %138 = vmatprep.subr.mxu0 0.0
    %139 = vmatpush2.msra.mxu0 0.0
    %140 = vmatprep.subr.mxu0 0.0
    %141 = vmatpush2.msra.mxu0 0.0
    %142 = vmatprep.subr.mxu0 0.0
    %143 = vmatpush2.msra.mxu0 0.0
    %144 = vmatprep.subr.mxu0 0.0
    %145 = vmatpush2.msra.mxu0 0.0
    %146 = vmatprep.subr.mxu0 0.0
    %147 = vmatpush2.msra.mxu0 0.0
    %148 = vmatprep.subr.mxu0 0.0
    %149 = vmatpush2.msra.mxu0 0.0
    %150 = vmatprep.subr.mxu0 0.0
    %151 = vmatpush2.msra.mxu0 0.0
    %152 = vmatprep.subr.mxu0 0.0
    %153 = vmatpush2.msra.mxu0 0.0
    %154 = vmatprep.subr.mxu0 0.0
    %155 = vmatpush2.msra.mxu0 0.0
    %156 = vmatprep.subr.mxu0 0.0
    %157 = vmatpush2.msra.mxu0 0.0
    %158 = vmatprep.subr.mxu0 0.0
    %159 = vmatpush2.msra.mxu0 0.0
    %160 = vmatprep.subr.mxu0 0.0
    %161 = vmatpush2.msra.mxu0 0.0
    %162 = vmatprep.subr.mxu0 0.0
    %163 = vmatpush2.msra.mxu0 0.0
    %164 = vmatprep.subr.mxu0 0.0
    %165 = vmatpush2.msra.mxu0 0.0
    %166 = vmatprep.mubr.f32.mxu0 0.0
    %167 = vmatmul.mubr.f32.gmra.mxu0 %v100
    %v168 = vpop.f32.mrf.mxu0
    %v169 = vadd.f32 %v96, %v168
    %v170 = vpop.f32.mrf.mxu0
    %171 = vdwg.mxu0
    %v172 = vmax.f32 %v169, 0.0
    %v173 = vld [vmem:[#allocation8] sm:$0xff]
    %v174 = vld [vmem:[#allocation8 + $0x8] sm:$0xff]
    %v175 = vld [vmem:[#allocation8 + $0x10] sm:$0xff]
    %v176 = vld [vmem:[#allocation8 + $0x18] sm:$0xff]
    %v177 = vld [vmem:[%s5] sm:$0x1]
    %v179 = vlaneseq
    %v180 = vshrl.u32 %v179, 7
    %v181 = vsub.s32 0, %v180
    %v182 = vrot.slane %v177, %v181
    %vm184 = vcmask 261120
    %v186 = vsel %vm184, %v172, 0
    %188 = vmatprep.subr.mxu0 0.0
    %189 = vmatpush1.msra.mxu0 0.0
    %190 = vmatprep.subr.mxu0 0.0
    %191 = vmatpush1.msra.mxu0 0.0
    %192 = vmatprep.subr.mxu0 0.0
    %193 = vmatpush1.msra.mxu0 0.0
    %194 = vmatprep.subr.mxu0 0.0
    %195 = vmatpush1.msra.mxu0 0.0
    %196 = vmatprep.subr.mxu0 0.0
    %197 = vmatpush1.msra.mxu0 0.0
    %198 = vmatprep.subr.mxu0 0.0
    %199 = vmatpush1.msra.mxu0 0.0
    %200 = vmatprep.subr.mxu0 0.0
    %201 = vmatpush1.msra.mxu0 0.0
    %202 = vmatprep.subr.mxu0 0.0
    %203 = vmatpush1.msra.mxu0 0.0
    %204 = vmatprep.subr.mxu0 0.0
    %205 = vmatpush1.msra.mxu0 0.0
    %206 = vmatprep.subr.mxu0 0.0
    %207 = vmatpush1.msra.mxu0 0.0
    %208 = vmatprep.subr.mxu0 0.0
    %209 = vmatpush1.msra.mxu0 0.0
    %210 = vmatprep.subr.mxu0 0.0
    %211 = vmatpush1.msra.mxu0 0.0
    %212 = vmatprep.subr.mxu0 0.0
    %213 = vmatpush1.msra.mxu0 %v176
    %214 = vmatprep.subr.mxu0 0.0
    %215 = vmatpush1.msra.mxu0 %v175
    %216 = vmatprep.subr.mxu0 0.0
    %217 = vmatpush1.msra.mxu0 %v174
    %218 = vmatprep.subr.mxu0 0.0
    %219 = vmatpush1.msra.mxu0 %v173
    %220 = vmatprep.subr.mxu0 0.0
    %221 = vmatpush2.msra.mxu0 0.0
    %222 = vmatprep.subr.mxu0 0.0
    %223 = vmatpush2.msra.mxu0 0.0
    %224 = vmatprep.subr.mxu0 0.0
    %225 = vmatpush2.msra.mxu0 0.0
    %226 = vmatprep.subr.mxu0 0.0
    %227 = vmatpush2.msra.mxu0 0.0
    %228 = vmatprep.subr.mxu0 0.0
    %229 = vmatpush2.msra.mxu0 0.0
    %230 = vmatprep.subr.mxu0 0.0
    %231 = vmatpush2.msra.mxu0 0.0
    %232 = vmatprep.subr.mxu0 0.0
    %233 = vmatpush2.msra.mxu0 0.0
    %234 = vmatprep.subr.mxu0 0.0
    %235 = vmatpush2.msra.mxu0 0.0
    %236 = vmatprep.subr.mxu0 0.0
    %237 = vmatpush2.msra.mxu0 0.0
    %238 = vmatprep.subr.mxu0 0.0
    %239 = vmatpush2.msra.mxu0 0.0
    %240 = vmatprep.subr.mxu0 0.0
    %241 = vmatpush2.msra.mxu0 0.0
    %242 = vmatprep.subr.mxu0 0.0
    %243 = vmatpush2.msra.mxu0 0.0
    %244 = vmatprep.subr.mxu0 0.0
    %245 = vmatpush2.msra.mxu0 0.0
    %246 = vmatprep.subr.mxu0 0.0
    %247 = vmatpush2.msra.mxu0 0.0
    %248 = vmatprep.subr.mxu0 0.0
    %249 = vmatpush2.msra.mxu0 0.0
    %250 = vmatprep.subr.mxu0 0.0
    %251 = vmatpush2.msra.mxu0 0.0
    %252 = vmatprep.mubr.f32.mxu0 0.0
    %253 = vmatmul.mubr.f32.gmra.mxu0 %v186
    %v254 = vpop.f32.mrf.mxu0
    %v255 = vadd.f32 %v182, %v254
    %v256 = vpop.f32.mrf.mxu0
    %257 = vdwg.mxu0
    %v258 = vmax.f32 %v255, 0.0
    %v259 = vld [vmem:[#allocation9] sm:$0xff]
    %v260 = vld [vmem:[#allocation9 + $0x8] sm:$0xff]
    %v261 = vld [vmem:[#allocation9 + $0x10] sm:$0xff]
    %v262 = vld [vmem:[#allocation9 + $0x18] sm:$0xff]
    %v263 = vld [vmem:[#allocation9 + $0x20] sm:$0xff]
    %v264 = vld [vmem:[#allocation9 + $0x28] sm:$0xff]
    %v265 = vld [vmem:[#allocation9 + $0x30] sm:$0xff]
    %v266 = vld [vmem:[#allocation9 + $0x38] sm:$0xff]
    %v267 = vld [vmem:[%s7] sm:$0x3]
    %v269 = vlaneseq
    %v270 = vshrl.u32 %v269, 7
    %v271 = vsub.s32 0, %v270
    %v272 = vrot.slane %v267, %v271
    %v273 = vlaneseq
    %v274 = vshrl.u32 %v273, 7
    %v275 = vsub.s32 1, %v274
    %v276 = vrot.slane %v267, %v275
    %v280 = vsel %vm184, %v258, 0
    %282 = vmatprep.subr.mxu0 0.0
    %283 = vmatpush1.msra.mxu0 0.0
    %284 = vmatprep.subr.mxu0 0.0
    %285 = vmatpush1.msra.mxu0 0.0
    %286 = vmatprep.subr.mxu0 0.0
    %287 = vmatpush1.msra.mxu0 0.0
    %288 = vmatprep.subr.mxu0 0.0
    %289 = vmatpush1.msra.mxu0 0.0
    %290 = vmatprep.subr.mxu0 0.0
    %291 = vmatpush1.msra.mxu0 0.0
    %292 = vmatprep.subr.mxu0 0.0
    %293 = vmatpush1.msra.mxu0 0.0
    %294 = vmatprep.subr.mxu0 0.0
    %295 = vmatpush1.msra.mxu0 0.0
    %296 = vmatprep.subr.mxu0 0.0
    %297 = vmatpush1.msra.mxu0 0.0
    %298 = vmatprep.subr.mxu0 0.0
    %299 = vmatpush1.msra.mxu0 0.0
    %300 = vmatprep.subr.mxu0 0.0
    %301 = vmatpush1.msra.mxu0 0.0
    %302 = vmatprep.subr.mxu0 0.0
    %303 = vmatpush1.msra.mxu0 0.0
    %304 = vmatprep.subr.mxu0 0.0
    %305 = vmatpush1.msra.mxu0 0.0
    %306 = vmatprep.subr.mxu0 %v266
    %307 = vmatpush1.msra.mxu0 %v265
    %308 = vmatprep.subr.mxu0 %v264
    %309 = vmatpush1.msra.mxu0 %v263
    %310 = vmatprep.subr.mxu0 %v262
    %311 = vmatpush1.msra.mxu0 %v261
    %312 = vmatprep.subr.mxu0 %v260
    %313 = vmatpush1.msra.mxu0 %v259
    %314 = vmatprep.subr.mxu0 0.0
    %315 = vmatpush2.msra.mxu0 0.0
    %316 = vmatprep.subr.mxu0 0.0
    %317 = vmatpush2.msra.mxu0 0.0
    %318 = vmatprep.subr.mxu0 0.0
    %319 = vmatpush2.msra.mxu0 0.0
    %320 = vmatprep.subr.mxu0 0.0
    %321 = vmatpush2.msra.mxu0 0.0
    %322 = vmatprep.subr.mxu0 0.0
    %323 = vmatpush2.msra.mxu0 0.0
    %324 = vmatprep.subr.mxu0 0.0
    %325 = vmatpush2.msra.mxu0 0.0
    %326 = vmatprep.subr.mxu0 0.0
    %327 = vmatpush2.msra.mxu0 0.0
    %328 = vmatprep.subr.mxu0 0.0
    %329 = vmatpush2.msra.mxu0 0.0
    %330 = vmatprep.subr.mxu0 0.0
    %331 = vmatpush2.msra.mxu0 0.0
    %332 = vmatprep.subr.mxu0 0.0
    %333 = vmatpush2.msra.mxu0 0.0
    %334 = vmatprep.subr.mxu0 0.0
    %335 = vmatpush2.msra.mxu0 0.0
    %336 = vmatprep.subr.mxu0 0.0
    %337 = vmatpush2.msra.mxu0 0.0
    %338 = vmatprep.subr.mxu0 0.0
    %339 = vmatpush2.msra.mxu0 0.0
    %340 = vmatprep.subr.mxu0 0.0
    %341 = vmatpush2.msra.mxu0 0.0
    %342 = vmatprep.subr.mxu0 0.0
    %343 = vmatpush2.msra.mxu0 0.0
    %344 = vmatprep.subr.mxu0 0.0
    %345 = vmatpush2.msra.mxu0 0.0
    %346 = vmatprep.mubr.f32.mxu0 0.0
    %347 = vmatmul.mubr.f32.gmra.mxu0 %v280
    %v348 = vpop.f32.mrf.mxu0
    %v349 = vadd.f32 %v272, %v348
    %v350 = vpop.f32.mrf.mxu0
    %v351 = vadd.f32 %v276, %v350
    %352 = vdwg.mxu0
    %v353 = vmax.f32 %v351, -20.0
    %v354 = vmin.f32 %v353, 2.0
    %v355 = vmul.f32 %v354, 1.442695
    %v356 = vpow.pop %v355
    %v357 = vld [vmem:[%s8] sm:$0xff]
    %v358 = vmul.f32 %v356, %v357
    %v359 = vadd.f32 %v349, %v358
    %v360 = vmul.f32 %v357, -0.5
    %v361 = vmul.f32 %v360, %v357
    %v362 = vsub.f32 %v361, %v354
    %v363 = vsub.f32 %v362, 0.9189385
    %v364 = vsub.f32 0.6931472, %v359
    %v365 = vmul.f32 %v359, -2.0
    %v366 = vmax.f32 %v365, 0.0
    %v367 = vand.u32 2147483647, %v365
    %v368 = vsub.f32 0.0, %v367
    %v369 = vmul.f32 %v368, 1.442695
    %v370 = vpow.pop %v369
    %v371 = vadd.f32 %v370, 1.0
    %v372 = vlog2.pop %v371
    %v373 = vmul.f32 %v372, 0.6931472
    %v374 = vmul.f32 -0.5, %v370
    %v375 = vadd.f32 %v374, 1.0
    %v376 = vmul.f32 %v375, %v370
    %v377 = vand.u32 2147483647, %v370
    %vm378 = vcmp.lt.f32.partialorder %v377, 0.0004427343
    %v379 = vsel %vm378, %v376, %v373
    %v380 = vadd.f32 %v366, %v379
    %v381 = vsub.f32 %v364, %v380
    %v382 = vmul.f32 %v381, 2.0
    %v383 = vsub.f32 %v363, %v382
    %vm384 = vcmask 64512
    %v385 = vsel %vm384, %v383, 0.0
    %386 = vadd.xlane.f32.xlu0 %v385
    %v387 = vpop.xlane.xlu0 %386
    %v388 = vtanh.pop %v359
    %v389 = vstv %s87
    %v390 = vmul.f32 %v389, %v388
    %391 = vst.msk [vmem:[#allocation11] sm:$0xff] %vm384, %v390
    %vm392 = vcmask 72768
    %393 = vst.msk [vmem:[#allocation11] sm:$0xff] %vm392, %v387
    // Predicated region
    $region54: #{tpu_custom_call.1} parent=1 // pred_check
      _
    $region55: #{tpu_custom_call.1} parent=1 // pred_check_branch
      %395 = sbr.rel (0) target = $region57
    $region56: #{tpu_custom_call.1} parent=1 // pred_region
      %s397 = ssub.s32 128, 128
      %398 = vsyncadd [#allocation5], %s397
      %s400 = sshll.u32 [#allocation11], 4
      %s401 = int_to_ptr.vmem [resolvable:$true] %s400
      %403 = dma.vmem_to_hbm [thread:$0]  %s401, 128, %s9, [#allocation5]
    $region57: #{tpu_custom_call.1} parent=1 // pred_fallthru
      _
    // Predicated region
    $region58: #{tpu_custom_call.1} parent=1 // pred_check
      _
    $region59: #{tpu_custom_call.1} parent=1 // pred_check_branch
      %405 = sbr.rel (0) target = $region61
    $region60: #{tpu_custom_call.1} parent=1 // pred_region
      %406 = dma.done [#allocation5], 128
    $region61: #{tpu_custom_call.1} parent=1 // pred_fallthru
      _
    %407 = vsyncpa [#allocation4], 1
    %408 = vsyncpa [#allocation7], 1
    %409 = vsyncpa [#allocation10], 1
    %410 = vsyncpa [#allocation5], 1

</llo_original>
